<compile_context>
chip_gen: v7x
topology: tpu7x:2x2x1
jax: 0.10.0
libtpu: 0.0.40
codegen_flags: <defaults>
</compile_context>

<pallas_src>
import functools

import jax
import jax.numpy as jnp
from jax.experimental import pallas as pl
from jax.experimental.pallas import tpu as pltpu

_LANE = 128  # lane width of a vreg / MXU tile edge


def _round_up(x, m):
    return (x + m - 1) // m * m


def _mlp_kernel(x_ref, w1_ref, b1_ref, w2_ref, b2_ref, o_ref):
    # Layer 1: MXU matmul with f32 accumulation, bias + ReLU on the VPU.
    h = jnp.dot(x_ref[...], w1_ref[...], preferred_element_type=jnp.float32)
    h = jnp.maximum(h + b1_ref[...], 0.0)          # (1, Hp) bias broadcasts

    # Layer 2: feed h straight back into the MXU (no VMEM staging), bias add,
    # then sigmoid via the single-EUP tanh identity (exact).
    z = jnp.dot(h.astype(w2_ref.dtype), w2_ref[...],
                preferred_element_type=jnp.float32)
    z = z + b2_ref[...]                            # (1, Op) bias broadcasts
    sig = 0.5 * jnp.tanh(0.5 * z) + 0.5
    o_ref[...] = (sig * 9.0 + 1.0).astype(o_ref.dtype)


def prepare_params(w1, b1, w2, b2, *, matmul_dtype=jnp.bfloat16):
    """Pad/cast the weights ONCE (outside the per-call forward).

    w1: (In, H), b1: (H,), w2: (H, O), b2: (O,).
    Hidden/output dims pad to 128 lanes (lane-dense MXU operands + stores);
    the contracting input dim pads only to the dtype's sublane multiple.
    Biases stay f32 (the bias/activation tail runs in f32).
    """
    In, H = w1.shape
    O = w2.shape[1]
    sub = 8 * (4 // jnp.dtype(matmul_dtype).itemsize)   # 8 for f32, 16 for bf16
    In_p = _round_up(In, sub)
    H_p = _round_up(H, _LANE)
    O_p = _round_up(O, _LANE)
    w1_p = jnp.pad(w1.astype(matmul_dtype), ((0, In_p - In), (0, H_p - H)))
    w2_p = jnp.pad(w2.astype(matmul_dtype), ((0, H_p - H), (0, O_p - O)))
    b1_p = jnp.pad(b1.astype(jnp.float32), (0, H_p - H)).reshape(1, H_p)
    b2_p = jnp.pad(b2.astype(jnp.float32), (0, O_p - O)).reshape(1, O_p)
    return w1_p, b1_p, w2_p, b2_p


@functools.partial(jax.jit, static_argnames=("out_features", "tb", "out_dtype"))
def grogginess_forward(x, w1_p, b1_p, w2_p, b2_p, *, out_features,
                       tb=1024, out_dtype=jnp.float32):
    """Forward pass. x: (B, In) f32; padded params from prepare_params.

    Returns (B, out_features) out_dtype (f32 by default, matching the module).
    """
    B, In = x.shape
    In_p, H_p = w1_p.shape
    O_p = w2_p.shape[1]
    matmul_dtype = w1_p.dtype
    sub = 8 * (4 // jnp.dtype(matmul_dtype).itemsize)

    # Batch tile: big (amortize ~0.35us/step overhead), multiple of the
    # sublane packing, capped at the (padded) batch.
    TB = _round_up(max(sub, min(tb, _round_up(B, sub))), sub)
    B_p = _round_up(B, TB)
    # v7x: the "parallel" grid axis is sharded across 2 TensorCores -- make
    # sure there are >= 2 batch tiles whenever the batch allows it.
    while B_p // TB < 2 and TB > sub:
        TB = max(sub, _round_up(TB // 2, sub))
        B_p = _round_up(B, TB)

    # Only the activations are padded per call (batch rows + tiny In pad).
    x_p = jnp.pad(x.astype(matmul_dtype), ((0, B_p - B), (0, In_p - In)))

    mm_bytes = jnp.dtype(matmul_dtype).itemsize
    out_bytes = jnp.dtype(out_dtype).itemsize
    cost = pl.CostEstimate(
        flops=2 * B_p * (In_p * H_p + H_p * O_p),
        transcendentals=B_p * O_p,
        bytes_accessed=(mm_bytes * (B_p * In_p + In_p * H_p + H_p * O_p)
                        + 4 * (H_p + O_p) + out_bytes * B_p * O_p),
    )

    out_p = pl.pallas_call(
        _mlp_kernel,
        out_shape=jax.ShapeDtypeStruct((B_p, O_p), out_dtype),
        grid=(B_p // TB,),
        in_specs=[
            # Activations stream: one (TB, In_p) tile per grid step
            # (last dim = full array dim, so no 128-lane padding of In).
            pl.BlockSpec((TB, In_p), lambda i: (i, 0)),
            # Weights/biases: constant block index -> loaded once, resident.
            pl.BlockSpec((In_p, H_p), lambda i: (0, 0)),
            pl.BlockSpec((1, H_p), lambda i: (0, 0)),
            pl.BlockSpec((H_p, O_p), lambda i: (0, 0)),
            pl.BlockSpec((1, O_p), lambda i: (0, 0)),
        ],
        # Lane-dense (TB, 128k) output tile -> unmasked full-width stores.
        out_specs=pl.BlockSpec((TB, O_p), lambda i: (i, 0)),
        compiler_params=pltpu.CompilerParams(
            dimension_semantics=("parallel",),
        ),
        cost_estimate=cost,
    )(x_p, w1_p, b1_p, w2_p, b2_p)

    return out_p[:B, :out_features]


def _torch_like_linear_init(kw, kb, fan_in, fan_out):
    """nn.Linear default init: U(-1/sqrt(fan_in), +1/sqrt(fan_in))."""
    bound = 1.0 / jnp.sqrt(jnp.float32(fan_in))
    w = jax.random.uniform(kw, (fan_in, fan_out), jnp.float32, -bound, bound)
    b = jax.random.uniform(kb, (fan_out,), jnp.float32, -bound, bound)
    return w, b


if __name__ == "__main__":
    # Small shapes consistent with the module.
    batch, input_size, hidden_size, output_size = 8, 32, 64, 16

    key = jax.random.PRNGKey(0)
    kx, kw1, kb1, kw2, kb2 = jax.random.split(key, 5)

    x = jax.random.normal(kx, (batch, input_size), jnp.float32)
    w1, b1 = _torch_like_linear_init(kw1, kb1, input_size, hidden_size)
    w2, b2 = _torch_like_linear_init(kw2, kb2, hidden_size, output_size)

    # Pure-JAX reference (exact f32).
    h_ref = jnp.maximum(x @ w1 + b1, 0.0)
    y_ref = jax.nn.sigmoid(h_ref @ w2 + b2) * 9.0 + 1.0

    # Default fast path: bf16 MXU inputs, f32 accumulation / tail / output.
    params_bf16 = prepare_params(w1, b1, w2, b2, matmul_dtype=jnp.bfloat16)
    out_bf16 = jax.block_until_ready(
        grogginess_forward(x, *params_bf16, out_features=output_size))
    assert out_bf16.shape == (batch, output_size)
    assert jnp.allclose(out_bf16, y_ref, atol=2e-1), (
        float(jnp.max(jnp.abs(out_bf16 - y_ref))))

    # f32 path: tight correctness check of the kernel structure.
    params_f32 = prepare_params(w1, b1, w2, b2, matmul_dtype=jnp.float32)
    out_f32 = jax.block_until_ready(
        grogginess_forward(x, *params_f32, out_features=output_size))
    assert out_f32.shape == (batch, output_size)
    assert jnp.allclose(out_f32, y_ref, atol=5e-3, rtol=5e-3), (
        float(jnp.max(jnp.abs(out_f32 - y_ref))))

    print("KERNEL_OK")
</pallas_src>

<mosaic_0001>
module attributes {stable_mosaic.version = 11 : i64} {
  func.func @_mlp_kernel(%arg0: i32, %arg1: memref<16x32xbf16, #tpu.memory_space<vmem>>, %arg2: memref<32x128xbf16, #tpu.memory_space<vmem>>, %arg3: memref<1x128xf32, #tpu.memory_space<vmem>>, %arg4: memref<128x128xbf16, #tpu.memory_space<vmem>>, %arg5: memref<1x128xf32, #tpu.memory_space<vmem>>, %arg6: memref<16x128xf32, #tpu.memory_space<vmem>>) attributes {dimension_semantics = [#tpu.dimension_semantics<parallel>], iteration_bounds = array<i64: 1>, scalar_prefetch = 0 : i64, scratch_operands = 0 : i64, tpu.core_type = #tpu.core_type<tc>, window_params = [{transform_indices = @transform_0, window_bounds = array<i64: 16, 32>}, {pipeline_mode = #tpu.pipeline_mode<synchronous>, transform_indices = @transform_1, window_bounds = array<i64: 32, 128>}, {pipeline_mode = #tpu.pipeline_mode<synchronous>, transform_indices = @transform_2, window_bounds = array<i64: 1, 128>}, {pipeline_mode = #tpu.pipeline_mode<synchronous>, transform_indices = @transform_3, window_bounds = array<i64: 128, 128>}, {pipeline_mode = #tpu.pipeline_mode<synchronous>, transform_indices = @transform_4, window_bounds = array<i64: 1, 128>}, {transform_indices = @transform_5, window_bounds = array<i64: 16, 128>}]} {
    %c0 = arith.constant 0 : index
    %c0_0 = arith.constant 0 : index
    %0 = vector.load %arg1[%c0, %c0_0] : memref<16x32xbf16, #tpu.memory_space<vmem>>, vector<16x32xbf16>
    %c0_1 = arith.constant 0 : index
    %c0_2 = arith.constant 0 : index
    %1 = vector.load %arg2[%c0_1, %c0_2] : memref<32x128xbf16, #tpu.memory_space<vmem>>, vector<32x128xbf16>
    %cst = arith.constant dense<0.000000e+00> : vector<16x128xf32>
    %2 = tpu.matmul %0, %1, %cst {dimension_numbers = #tpu.dot_dimension_numbers<[1], [0], [0], [1], [0, 0, 1, 1], [], []>} : vector<16x32xbf16>, vector<32x128xbf16>, vector<16x128xf32> -> vector<16x128xf32>
    %c0_3 = arith.constant 0 : index
    %c0_4 = arith.constant 0 : index
    %3 = vector.load %arg3[%c0_3, %c0_4] : memref<1x128xf32, #tpu.memory_space<vmem>>, vector<1x128xf32>
    %4 = vector.broadcast %3 : vector<1x128xf32> to vector<16x128xf32>
    %5 = arith.addf %2, %4 : vector<16x128xf32>
    %cst_5 = arith.constant 0.000000e+00 : f32
    %6 = vector.broadcast %cst_5 : f32 to vector<16x128xf32>
    %7 = arith.maximumf %5, %6 : vector<16x128xf32>
    %8 = arith.truncf %7 : vector<16x128xf32> to vector<16x128xbf16>
    %c0_6 = arith.constant 0 : index
    %c0_7 = arith.constant 0 : index
    %9 = vector.load %arg4[%c0_6, %c0_7] : memref<128x128xbf16, #tpu.memory_space<vmem>>, vector<128x128xbf16>
    %cst_8 = arith.constant dense<0.000000e+00> : vector<16x128xf32>
    %10 = tpu.matmul %8, %9, %cst_8 {dimension_numbers = #tpu.dot_dimension_numbers<[1], [0], [0], [1], [0, 0, 1, 1], [], []>} : vector<16x128xbf16>, vector<128x128xbf16>, vector<16x128xf32> -> vector<16x128xf32>
    %c0_9 = arith.constant 0 : index
    %c0_10 = arith.constant 0 : index
    %11 = vector.load %arg5[%c0_9, %c0_10] : memref<1x128xf32, #tpu.memory_space<vmem>>, vector<1x128xf32>
    %12 = vector.broadcast %11 : vector<1x128xf32> to vector<16x128xf32>
    %13 = arith.addf %10, %12 : vector<16x128xf32>
    %cst_11 = arith.constant 5.000000e-01 : f32
    %14 = vector.broadcast %cst_11 : f32 to vector<16x128xf32>
    %15 = arith.mulf %14, %13 : vector<16x128xf32>
    %16 = math.tanh %15 : vector<16x128xf32>
    %cst_12 = arith.constant 5.000000e-01 : f32
    %17 = vector.broadcast %cst_12 : f32 to vector<16x128xf32>
    %18 = arith.mulf %17, %16 : vector<16x128xf32>
    %cst_13 = arith.constant 5.000000e-01 : f32
    %19 = vector.broadcast %cst_13 : f32 to vector<16x128xf32>
    %20 = arith.addf %18, %19 : vector<16x128xf32>
    %cst_14 = arith.constant 9.000000e+00 : f32
    %21 = vector.broadcast %cst_14 : f32 to vector<16x128xf32>
    %22 = arith.mulf %20, %21 : vector<16x128xf32>
    %cst_15 = arith.constant 1.000000e+00 : f32
    %23 = vector.broadcast %cst_15 : f32 to vector<16x128xf32>
    %24 = arith.addf %22, %23 : vector<16x128xf32>
    %c0_16 = arith.constant 0 : index
    %c0_17 = arith.constant 0 : index
    %25 = vector.load %arg6[%c0_16, %c0_17] : memref<16x128xf32, #tpu.memory_space<vmem>>, vector<16x128xf32>
    tpu.vector_store %arg6[%c0_16, %c0_17], %24 {strides = array<i32>} : memref<16x128xf32, #tpu.memory_space<vmem>>, vector<16x128xf32>,
    return
  }
  func.func @transform_0(%arg0: i32) -> (i32, i32) {
    %c0_i32 = arith.constant 0 : i32
    %c0_i32_0 = arith.constant 0 : i32
    return %arg0, %c0_i32 : i32, i32
  }
  func.func @transform_1(%arg0: i32) -> (i32, i32) {
    %c0_i32 = arith.constant 0 : i32
    %c0_i32_0 = arith.constant 0 : i32
    %c0_i32_1 = arith.constant 0 : i32
    return %c0_i32, %c0_i32_0 : i32, i32
  }
  func.func @transform_2(%arg0: i32) -> (i32, i32) {
    %c0_i32 = arith.constant 0 : i32
    %c0_i32_0 = arith.constant 0 : i32
    %c0_i32_1 = arith.constant 0 : i32
    return %c0_i32, %c0_i32_0 : i32, i32
  }
  func.func @transform_3(%arg0: i32) -> (i32, i32) {
    %c0_i32 = arith.constant 0 : i32
    %c0_i32_0 = arith.constant 0 : i32
    %c0_i32_1 = arith.constant 0 : i32
    return %c0_i32, %c0_i32_0 : i32, i32
  }
  func.func @transform_4(%arg0: i32) -> (i32, i32) {
    %c0_i32 = arith.constant 0 : i32
    %c0_i32_0 = arith.constant 0 : i32
    %c0_i32_1 = arith.constant 0 : i32
    return %c0_i32, %c0_i32_0 : i32, i32
  }
  func.func @transform_5(%arg0: i32) -> (i32, i32) {
    %c0_i32 = arith.constant 0 : i32
    %c0_i32_0 = arith.constant 0 : i32
    return %arg0, %c0_i32 : i32, i32
  }
}

</mosaic_0001>

<llo_original>
// kernel: grogginess_forward.1
$region0: #{grogginess_forward.1}
  #allocation0 [shape = 'u32[]', space=smem, size = 0x4, offset = 0x4, fixed_abs, tag = 'smem constant byte address 0x4 - core index']
  #allocation1 [shape = 'u32[144,128]{1,0:T(1,128)}', space=vmem, size = 0x12000, scoped, tag = 'internal scratch']
  %s0 = inlined_call_operand.vmem [shape: bf16[16,32], index: 0, kind: input, shape index: {}]
  %s1 = inlined_call_operand.vmem [shape: bf16[32,128], index: 1, kind: input, shape index: {}]
  %s2 = inlined_call_operand.vmem [shape: f32[1,128], index: 2, kind: input, shape index: {}]
  %s3 = inlined_call_operand.hbm [shape: bf16[128,128], index: 3, kind: input, shape index: {}]
  %s4 = inlined_call_operand.vmem [shape: f32[1,128], index: 4, kind: input, shape index: {}]
  %s5 = inlined_call_operand.vmem [shape: f32[16,128], index: 5, kind: output, shape index: {}]
  %s6 = sld [smem:[#allocation0]]
  $region34: #{grogginess_forward.1} parent=0
    _
  %s8 = ssub.s32 1, %s6
  %s9 = scalar_select 0, %s8, %s6
  $region1: #{grogginess_forward.1} parent=0
    #allocation2 [shape = 'u8[32768]{0}', space=vmem, size = 0x8000, scoped, tag = 'input window, operand 3, single buffered']
    #allocation3 [shape = 's32[1]{0}', space=sflag, size = 0x4, scoped, tag = 'scoped memory for grogginess_forward.1']
    %10 = vsyncpa [#allocation3], 0
    // Predicated region
    $region2: #{grogginess_forward.1} parent=1 // pred_check
      _
    $region3: #{grogginess_forward.1} parent=1 // pred_check_branch
      %12 = sbr.rel (0) target = $region5
    $region4: #{grogginess_forward.1} parent=1 // pred_region
      _
    $region5: #{grogginess_forward.1} parent=1 // pred_fallthru
      _
    // Predicated region
    $region6: #{grogginess_forward.1} parent=1 // pred_check
      _
    $region7: #{grogginess_forward.1} parent=1 // pred_check_branch
      %14 = sbr.rel (0) target = $region9
    $region8: #{grogginess_forward.1} parent=1 // pred_region
      _
    $region9: #{grogginess_forward.1} parent=1 // pred_fallthru
      _
    // Predicated region
    $region10: #{grogginess_forward.1} parent=1 // pred_check
      _
    $region11: #{grogginess_forward.1} parent=1 // pred_check_branch
      %16 = sbr.rel (0) target = $region13
    $region12: #{grogginess_forward.1} parent=1 // pred_region
      _
    $region13: #{grogginess_forward.1} parent=1 // pred_fallthru
      _
    // Predicated region
    $region14: #{grogginess_forward.1} parent=1 // pred_check
      _
    $region15: #{grogginess_forward.1} parent=1 // pred_check_branch
      %18 = sbr.rel (0) target = $region17
    $region16: #{grogginess_forward.1} parent=1 // pred_region
      %s20 = ssub.s32 1024, 1024
      %21 = vsyncadd [#allocation3], %s20
      %s22 = sshll.u32 [#allocation2], 4
      %s23 = int_to_ptr.vmem [resolvable:$true] %s22
      %28 = dma.hbm_to_vmem [thread:$0]  %s3, 1024, %s23, [#allocation3], 64, 64, 4
    $region17: #{grogginess_forward.1} parent=1 // pred_fallthru
      _
    // Predicated region
    $region18: #{grogginess_forward.1} parent=1 // pred_check
      _
    $region19: #{grogginess_forward.1} parent=1 // pred_check_branch
      %30 = sbr.rel (0) target = $region21
    $region20: #{grogginess_forward.1} parent=1 // pred_region
      _
    $region21: #{grogginess_forward.1} parent=1 // pred_fallthru
      _
    // Predicated region
    $region22: #{grogginess_forward.1} parent=1 // pred_check
      _
    $region23: #{grogginess_forward.1} parent=1 // pred_check_branch
      %32 = sbr.rel (0) target = $region25
    $region24: #{grogginess_forward.1} parent=1 // pred_region
      %33 = dma.done [#allocation3], 1024
    $region25: #{grogginess_forward.1} parent=1 // pred_fallthru
      _
    %v35 = vld [vmem:[%s0] sm:$0xf]
    %v36 = vld [vmem:[%s0 + $0x4] sm:$0xf]
    %v37 = vld [vmem:[%s1] sm:$0xf]
    %v38 = vld [vmem:[%s1 + $0x4] sm:$0xf]
    %v39 = vld [vmem:[%s1 + $0x8] sm:$0xf]
    %v40 = vld [vmem:[%s1 + $0xc] sm:$0xf]
    %v41 = vld [vmem:[%s2] sm:$0x1]
    %v43 = vlaneseq
    %v44 = vshrl.u32 %v43, 7
    %v45 = vsub.s32 0, %v44
    %v46 = vrot.slane %v41, %v45
    %v50 = vunpack.c.l.b16 %v35
    %v51 = vunpack.c.l.b16 %v36
    %v52 = vpack.c.b16 %v51, %v50
    %v57 = vunpack.c.l.b16 %v37
    %v58 = vunpack.c.l.b16 %v38
    %v59 = vunpack.c.l.b16 %v39
    %v60 = vunpack.c.l.b16 %v40
    %v61 = vpack.c.b16 %v58, %v57
    %v62 = vpack.c.b16 %v60, %v59
    %vm65 = vcmask 261120
    %v67 = vsel %vm65, %v52, 0
    %69 = vmatprep.subr.bf16.mxu0 0
    %70 = vmatpush1.bf16.msra.mxu0 %v61
    %71 = vmatprep.subr.bf16.mxu0 0
    %72 = vmatpush1.bf16.msra.mxu0 %v62
    %73 = vmatprep.subr.bf16.mxu0 0
    %74 = vmatpush1.bf16.msra.mxu0 0
    %75 = vmatprep.subr.bf16.mxu0 0
    %76 = vmatpush1.bf16.msra.mxu0 0
    %77 = vmatprep.subr.bf16.mxu0 0
    %78 = vmatpush1.bf16.msra.mxu0 0
    %79 = vmatprep.subr.bf16.mxu0 0
    %80 = vmatpush1.bf16.msra.mxu0 0
    %81 = vmatprep.subr.bf16.mxu0 0
    %82 = vmatpush1.bf16.msra.mxu0 0
    %83 = vmatprep.subr.bf16.mxu0 0
    %84 = vmatpush1.bf16.msra.mxu0 0
    %85 = vmatprep.subr.bf16.mxu0 0
    %86 = vmatpush1.bf16.msra.mxu0 0
    %87 = vmatprep.subr.bf16.mxu0 0
    %88 = vmatpush1.bf16.msra.mxu0 0
    %89 = vmatprep.subr.bf16.mxu0 0
    %90 = vmatpush1.bf16.msra.mxu0 0
    %91 = vmatprep.subr.bf16.mxu0 0
    %92 = vmatpush1.bf16.msra.mxu0 0
    %93 = vmatprep.subr.bf16.mxu0 0
    %94 = vmatpush1.bf16.msra.mxu0 0
    %95 = vmatprep.subr.bf16.mxu0 0
    %96 = vmatpush1.bf16.msra.mxu0 0
    %97 = vmatprep.subr.bf16.mxu0 0
    %98 = vmatpush1.bf16.msra.mxu0 0
    %99 = vmatprep.subr.bf16.mxu0 0
    %100 = vmatpush1.bf16.msra.mxu0 0
    %101 = vmatprep.mubr.bf16.mxu0 0
    %102 = vmatmul.mubr.bf16.gmra.mrb[0].mxu0 %v67
    %v103 = vpop.f32.mrb[0].mxu0
    %v104 = vadd.f32 %v46, %v103
    %v105 = vpop.f32.mrb[0].mxu0
    %v106 = vpop.f32.mrb[0].mxu0
    %v107 = vadd.f32 %v46, %v106
    %v108 = vpop.f32.mrb[0].mxu0
    %109 = vdwg.mxu0
    %v110 = vmax.f32 %v104, 0.0
    %v111 = vmax.f32 %v107, 0.0
    %v112 = vpack.c.bf16 %v111, %v110
    %v113 = vld [vmem:[#allocation2] sm:$0xf]
    %v114 = vld [vmem:[#allocation2 + $0x4] sm:$0xf]
    %v115 = vld [vmem:[#allocation2 + $0x8] sm:$0xf]
    %v116 = vld [vmem:[#allocation2 + $0xc] sm:$0xf]
    %v117 = vld [vmem:[#allocation2 + $0x10] sm:$0xf]
    %v118 = vld [vmem:[#allocation2 + $0x14] sm:$0xf]
    %v119 = vld [vmem:[#allocation2 + $0x18] sm:$0xf]
    %v120 = vld [vmem:[#allocation2 + $0x1c] sm:$0xf]
    %v121 = vld [vmem:[#allocation2 + $0x20] sm:$0xf]
    %v122 = vld [vmem:[#allocation2 + $0x24] sm:$0xf]
    %v123 = vld [vmem:[#allocation2 + $0x28] sm:$0xf]
    %v124 = vld [vmem:[#allocation2 + $0x2c] sm:$0xf]
    %v125 = vld [vmem:[#allocation2 + $0x30] sm:$0xf]
    %v126 = vld [vmem:[#allocation2 + $0x34] sm:$0xf]
    %v127 = vld [vmem:[#allocation2 + $0x38] sm:$0xf]
    %v128 = vld [vmem:[#allocation2 + $0x3c] sm:$0xf]
    %v129 = vld [vmem:[%s4] sm:$0x1]
    %v131 = vlaneseq
    %v132 = vshrl.u32 %v131, 7
    %v133 = vsub.s32 0, %v132
    %v134 = vrot.slane %v129, %v133
    %v152 = vunpack.c.l.b16 %v113
    %v153 = vunpack.c.l.b16 %v114
    %v154 = vunpack.c.l.b16 %v115
    %v155 = vunpack.c.l.b16 %v116
    %v156 = vunpack.c.l.b16 %v117
    %v157 = vunpack.c.l.b16 %v118
    %v158 = vunpack.c.l.b16 %v119
    %v159 = vunpack.c.l.b16 %v120
    %v160 = vunpack.c.l.b16 %v121
    %v161 = vunpack.c.l.b16 %v122
    %v162 = vunpack.c.l.b16 %v123
    %v163 = vunpack.c.l.b16 %v124
    %v164 = vunpack.c.l.b16 %v125
    %v165 = vunpack.c.l.b16 %v126
    %v166 = vunpack.c.l.b16 %v127
    %v167 = vunpack.c.l.b16 %v128
    %v168 = vpack.c.b16 %v153, %v152
    %v169 = vpack.c.b16 %v155, %v154
    %v170 = vpack.c.b16 %v157, %v156
    %v171 = vpack.c.b16 %v159, %v158
    %v172 = vpack.c.b16 %v161, %v160
    %v173 = vpack.c.b16 %v163, %v162
    %v174 = vpack.c.b16 %v165, %v164
    %v175 = vpack.c.b16 %v167, %v166
    %184 = vmatprep.subr.bf16.mxu0 0
    %185 = vmatpush1.bf16.msra.mxu0 %v168
    %186 = vmatprep.subr.bf16.mxu0 0
    %187 = vmatpush1.bf16.msra.mxu0 %v169
    %188 = vmatprep.subr.bf16.mxu0 0
    %189 = vmatpush1.bf16.msra.mxu0 %v170
    %190 = vmatprep.subr.bf16.mxu0 0
    %191 = vmatpush1.bf16.msra.mxu0 %v171
    %192 = vmatprep.subr.bf16.mxu0 0
    %193 = vmatpush1.bf16.msra.mxu0 %v172
    %194 = vmatprep.subr.bf16.mxu0 0
    %195 = vmatpush1.bf16.msra.mxu0 %v173
    %196 = vmatprep.subr.bf16.mxu0 0
    %197 = vmatpush1.bf16.msra.mxu0 %v174
    %198 = vmatprep.subr.bf16.mxu0 0
    %199 = vmatpush1.bf16.msra.mxu0 %v175
    %200 = vmatprep.subr.bf16.mxu0 0
    %201 = vmatpush1.bf16.msra.mxu0 0
    %202 = vmatprep.subr.bf16.mxu0 0
    %203 = vmatpush1.bf16.msra.mxu0 0
    %204 = vmatprep.subr.bf16.mxu0 0
    %205 = vmatpush1.bf16.msra.mxu0 0
    %206 = vmatprep.subr.bf16.mxu0 0
    %207 = vmatpush1.bf16.msra.mxu0 0
    %208 = vmatprep.subr.bf16.mxu0 0
    %209 = vmatpush1.bf16.msra.mxu0 0
    %210 = vmatprep.subr.bf16.mxu0 0
    %211 = vmatpush1.bf16.msra.mxu0 0
    %212 = vmatprep.subr.bf16.mxu0 0
    %213 = vmatpush1.bf16.msra.mxu0 0
    %214 = vmatprep.subr.bf16.mxu0 0
    %215 = vmatpush1.bf16.msra.mxu0 0
    %216 = vmatprep.mubr.bf16.mxu0 0
    %217 = vmatmul.mubr.bf16.gmra.mrb[0].mxu0 %v112
    %v218 = vpop.f32.mrb[0].mxu0
    %v219 = vadd.f32 %v134, %v218
    %v220 = vpop.f32.mrb[0].mxu0
    %v221 = vpop.f32.mrb[0].mxu0
    %v222 = vadd.f32 %v134, %v221
    %v223 = vpop.f32.mrb[0].mxu0
    %224 = vdwg.mxu0
    %v225 = vmul.f32 %v219, 0.5
    %v226 = vmul.f32 %v222, 0.5
    %v227 = vtanh.pop %v225
    %v228 = vtanh.pop %v226
    %v229 = vmul.f32 %v227, 0.5
    %v230 = vmul.f32 %v228, 0.5
    %v231 = vadd.f32 %v229, 0.5
    %v232 = vadd.f32 %v230, 0.5
    %v233 = vmul.f32 %v231, 9.0
    %v234 = vmul.f32 %v232, 9.0
    %v235 = vadd.f32 %v233, 1.0
    %v236 = vadd.f32 %v234, 1.0
    %237 = vst [vmem:[%s5] sm:$0xff] %v235
    %238 = vst [vmem:[%s5 + $0x8] sm:$0xff] %v236
    // Predicated region
    $region26: #{grogginess_forward.1} parent=1 // pred_check
      _
    $region27: #{grogginess_forward.1} parent=1 // pred_check_branch
      %240 = sbr.rel (0) target = $region29
    $region28: #{grogginess_forward.1} parent=1 // pred_region
      _
    $region29: #{grogginess_forward.1} parent=1 // pred_fallthru
      _
    // Predicated region
    $region30: #{grogginess_forward.1} parent=1 // pred_check
      _
    $region31: #{grogginess_forward.1} parent=1 // pred_check_branch
      %242 = sbr.rel (0) target = $region33
    $region32: #{grogginess_forward.1} parent=1 // pred_region
      _
    $region33: #{grogginess_forward.1} parent=1 // pred_fallthru
      _
    %243 = vsyncpa [#allocation3], 1

</llo_original>
